<compile_context>
chip_gen: v6e
topology: v6e:2x2x1
jax: 0.10.0
libtpu: 0.0.40
codegen_flags: <defaults>
</compile_context>

<pallas_src>
import jax
import jax.numpy as jnp
from jax.experimental import pallas as pl
from jax.experimental.pallas import tpu as pltpu

# ----------------------- model dimensions (small) ---------------------------
BATCH = 256
IN_DIM = 16
HID_DIM = 32
LAT_DIM = 8

MAX_TILE_B = 512   # single grid step up to this many rows; tile above it


# ------------------------------ Pallas kernel -------------------------------
def _encoder_kernel(
    x_ref,            # (tile_b, IN_DIM)
    w1_ref, b1_ref,   # (IN_DIM, HID_DIM), (1, HID_DIM)
    w2_ref, b2_ref,   # (HID_DIM, HID_DIM), (1, HID_DIM)
    wh_ref, bh_ref,   # fused head: (HID_DIM, 2*LAT), (1, 2*LAT)
    mu_ref,           # (tile_b, LAT)
    lv_ref,           # (tile_b, LAT)
):
    # Trunk: Linear -> ReLU -> Linear -> ReLU (MXU matmuls, f32 accumulation).
    h = jnp.dot(x_ref[...], w1_ref[...], preferred_element_type=jnp.float32)
    h = jnp.maximum(h + b1_ref[...], 0.0)

    h = jnp.dot(h, w2_ref[...], preferred_element_type=jnp.float32)
    h = jnp.maximum(h + b2_ref[...], 0.0)

    # Fused mu|logvar head: one matmul, then static lane split into the two outs.
    out = jnp.dot(h, wh_ref[...], preferred_element_type=jnp.float32) + bh_ref[...]
    lat = mu_ref.shape[1]
    mu_ref[...] = out[:, :lat].astype(mu_ref.dtype)
    lv_ref[...] = out[:, lat:2 * lat].astype(lv_ref.dtype)


# ------------------------------- wrapper -------------------------------------
def prepare_params(params):
    """One-time parameter prep (outside the hot path): fuse the mu/logvar head.

    Input weights are already (in, out); biases (1, out).
    """
    return {
        "w1": params["w1"], "b1": params["b1"],
        "w2": params["w2"], "b2": params["b2"],
        "wh": jnp.concatenate([params["wmu"], params["wlv"]], axis=1),
        "bh": jnp.concatenate([params["bmu"], params["blv"]], axis=1),
    }


def _choose_tile_b(b):
    b8 = ((b + 7) // 8) * 8          # sublane-align
    return b8 if b8 <= MAX_TILE_B else MAX_TILE_B


def encoder_forward(x, prep):
    """Fused VAE-encoder forward (mu, logvar). `prep` comes from prepare_params."""
    b, f = x.shape
    hid = prep["w1"].shape[1]
    lat = prep["wh"].shape[1] // 2

    tile_b = _choose_tile_b(b)
    b_pad = pl.cdiv(b, tile_b) * tile_b
    x_p = jnp.pad(x, ((0, b_pad - b), (0, 0))) if b_pad != b else x

    grid_len = b_pad // tile_b
    grid = (grid_len,)

    # Streamed blocks (full last dim -> legal, no 128-lane padding needed).
    x_spec = pl.BlockSpec((tile_b, f), lambda i: (i, 0))
    mu_spec = pl.BlockSpec((tile_b, lat), lambda i: (i, 0))
    lv_spec = pl.BlockSpec((tile_b, lat), lambda i: (i, 0))
    # Resident weights / biases (same block every step -> no re-DMA).
    w1_spec = pl.BlockSpec((f, hid), lambda i: (0, 0))
    b1_spec = pl.BlockSpec((1, hid), lambda i: (0, 0))
    w2_spec = pl.BlockSpec((hid, hid), lambda i: (0, 0))
    b2_spec = pl.BlockSpec((1, hid), lambda i: (0, 0))
    wh_spec = pl.BlockSpec((hid, 2 * lat), lambda i: (0, 0))
    bh_spec = pl.BlockSpec((1, 2 * lat), lambda i: (0, 0))

    # Megacore split only pays off with >= 2 steps per core.
    semantics = ("parallel",) if grid_len >= 4 else ("arbitrary",)

    mu, lv = pl.pallas_call(
        _encoder_kernel,
        grid=grid,
        in_specs=[x_spec, w1_spec, b1_spec, w2_spec, b2_spec, wh_spec, bh_spec],
        out_specs=[mu_spec, lv_spec],
        out_shape=(
            jax.ShapeDtypeStruct((b_pad, lat), jnp.float32),
            jax.ShapeDtypeStruct((b_pad, lat), jnp.float32),
        ),
        compiler_params=pltpu.CompilerParams(dimension_semantics=semantics),
    )(x_p, prep["w1"], prep["b1"], prep["w2"], prep["b2"], prep["wh"], prep["bh"])

    if b_pad != b:
        mu, lv = mu[:b], lv[:b]
    return mu, lv


# --------------------------- parameter construction --------------------------
def make_params(key):
    """Deterministic synthetic parameters matching the nn.Sequential shapes.

    PyTorch nn.Linear(in, out) stores weight (out, in); here we keep the
    transpose (in, out) so the kernel computes x @ W + b directly.
    """
    ks = jax.random.split(key, 8)
    scale = 0.1
    return {
        "w1": scale * jax.random.normal(ks[0], (IN_DIM, HID_DIM), jnp.float32),
        "b1": scale * jax.random.normal(ks[1], (1, HID_DIM), jnp.float32),
        "w2": scale * jax.random.normal(ks[2], (HID_DIM, HID_DIM), jnp.float32),
        "b2": scale * jax.random.normal(ks[3], (1, HID_DIM), jnp.float32),
        "wmu": scale * jax.random.normal(ks[4], (HID_DIM, LAT_DIM), jnp.float32),
        "bmu": scale * jax.random.normal(ks[5], (1, LAT_DIM), jnp.float32),
        "wlv": scale * jax.random.normal(ks[6], (HID_DIM, LAT_DIM), jnp.float32),
        "blv": scale * jax.random.normal(ks[7], (1, LAT_DIM), jnp.float32),
    }


def reference_forward(x, p):
    h = jnp.maximum(x @ p["w1"] + p["b1"], 0.0)
    h = jnp.maximum(h @ p["w2"] + p["b2"], 0.0)
    return h @ p["wmu"] + p["bmu"], h @ p["wlv"] + p["blv"]


# ----------------------------------- main ------------------------------------
if __name__ == "__main__":
    key = jax.random.PRNGKey(0)
    k_x, k_p = jax.random.split(key)
    x = jax.random.normal(k_x, (BATCH, IN_DIM), jnp.float32)
    params = make_params(k_p)

    prep = prepare_params(params)            # one-time head fusion (cold path)
    fwd = jax.jit(encoder_forward)

    mu, logvar = fwd(x, prep)
    jax.block_until_ready((mu, logvar))

    # sanity check against a pure-JAX reference
    mu_ref, lv_ref = reference_forward(x, params)
    assert mu.shape == (BATCH, LAT_DIM) and logvar.shape == (BATCH, LAT_DIM)
    assert jnp.allclose(mu, mu_ref, atol=1e-5, rtol=1e-5)
    assert jnp.allclose(logvar, lv_ref, atol=1e-5, rtol=1e-5)

    print("KERNEL_OK")
</pallas_src>

<mosaic_0001>
module attributes {stable_mosaic.version = 11 : i64} {
  func.func @_encoder_kernel(%arg0: i32, %arg1: memref<256x16xf32, #tpu.memory_space<vmem>>, %arg2: memref<16x32xf32, #tpu.memory_space<vmem>>, %arg3: memref<1x32xf32, #tpu.memory_space<vmem>>, %arg4: memref<32x32xf32, #tpu.memory_space<vmem>>, %arg5: memref<1x32xf32, #tpu.memory_space<vmem>>, %arg6: memref<32x16xf32, #tpu.memory_space<vmem>>, %arg7: memref<1x16xf32, #tpu.memory_space<vmem>>, %arg8: memref<256x8xf32, #tpu.memory_space<vmem>>, %arg9: memref<256x8xf32, #tpu.memory_space<vmem>>) attributes {dimension_semantics = [#tpu.dimension_semantics<arbitrary>], iteration_bounds = array<i64: 1>, scalar_prefetch = 0 : i64, scratch_operands = 0 : i64, tpu.core_type = #tpu.core_type<tc>, window_params = [{transform_indices = @transform_0, window_bounds = array<i64: 256, 16>}, {pipeline_mode = #tpu.pipeline_mode<synchronous>, transform_indices = @transform_1, window_bounds = array<i64: 16, 32>}, {pipeline_mode = #tpu.pipeline_mode<synchronous>, transform_indices = @transform_2, window_bounds = array<i64: 1, 32>}, {pipeline_mode = #tpu.pipeline_mode<synchronous>, transform_indices = @transform_3, window_bounds = array<i64: 32, 32>}, {pipeline_mode = #tpu.pipeline_mode<synchronous>, transform_indices = @transform_4, window_bounds = array<i64: 1, 32>}, {pipeline_mode = #tpu.pipeline_mode<synchronous>, transform_indices = @transform_5, window_bounds = array<i64: 32, 16>}, {pipeline_mode = #tpu.pipeline_mode<synchronous>, transform_indices = @transform_6, window_bounds = array<i64: 1, 16>}, {transform_indices = @transform_7, window_bounds = array<i64: 256, 8>}, {transform_indices = @transform_8, window_bounds = array<i64: 256, 8>}]} {
    %c0 = arith.constant 0 : index
    %c0_0 = arith.constant 0 : index
    %0 = vector.load %arg1[%c0, %c0_0] : memref<256x16xf32, #tpu.memory_space<vmem>>, vector<256x16xf32>
    %c0_1 = arith.constant 0 : index
    %c0_2 = arith.constant 0 : index
    %1 = vector.load %arg2[%c0_1, %c0_2] : memref<16x32xf32, #tpu.memory_space<vmem>>, vector<16x32xf32>
    %cst = arith.constant dense<0.000000e+00> : vector<256x32xf32>
    %2 = tpu.matmul %0, %1, %cst {dimension_numbers = #tpu.dot_dimension_numbers<[1], [0], [0], [1], [0, 0, 1, 1], [], []>} : vector<256x16xf32>, vector<16x32xf32>, vector<256x32xf32> -> vector<256x32xf32>
    %c0_3 = arith.constant 0 : index
    %c0_4 = arith.constant 0 : index
    %3 = vector.load %arg3[%c0_3, %c0_4] : memref<1x32xf32, #tpu.memory_space<vmem>>, vector<1x32xf32>
    %4 = vector.broadcast %3 : vector<1x32xf32> to vector<256x32xf32>
    %5 = arith.addf %2, %4 : vector<256x32xf32>
    %cst_5 = arith.constant 0.000000e+00 : f32
    %6 = vector.broadcast %cst_5 : f32 to vector<256x32xf32>
    %7 = arith.maximumf %5, %6 : vector<256x32xf32>
    %c0_6 = arith.constant 0 : index
    %c0_7 = arith.constant 0 : index
    %8 = vector.load %arg4[%c0_6, %c0_7] : memref<32x32xf32, #tpu.memory_space<vmem>>, vector<32x32xf32>
    %cst_8 = arith.constant dense<0.000000e+00> : vector<256x32xf32>
    %9 = tpu.matmul %7, %8, %cst_8 {dimension_numbers = #tpu.dot_dimension_numbers<[1], [0], [0], [1], [0, 0, 1, 1], [], []>} : vector<256x32xf32>, vector<32x32xf32>, vector<256x32xf32> -> vector<256x32xf32>
    %c0_9 = arith.constant 0 : index
    %c0_10 = arith.constant 0 : index
    %10 = vector.load %arg5[%c0_9, %c0_10] : memref<1x32xf32, #tpu.memory_space<vmem>>, vector<1x32xf32>
    %11 = vector.broadcast %10 : vector<1x32xf32> to vector<256x32xf32>
    %12 = arith.addf %9, %11 : vector<256x32xf32>
    %cst_11 = arith.constant 0.000000e+00 : f32
    %13 = vector.broadcast %cst_11 : f32 to vector<256x32xf32>
    %14 = arith.maximumf %12, %13 : vector<256x32xf32>
    %c0_12 = arith.constant 0 : index
    %c0_13 = arith.constant 0 : index
    %15 = vector.load %arg6[%c0_12, %c0_13] : memref<32x16xf32, #tpu.memory_space<vmem>>, vector<32x16xf32>
    %cst_14 = arith.constant dense<0.000000e+00> : vector<256x16xf32>
    %16 = tpu.matmul %14, %15, %cst_14 {dimension_numbers = #tpu.dot_dimension_numbers<[1], [0], [0], [1], [0, 0, 1, 1], [], []>} : vector<256x32xf32>, vector<32x16xf32>, vector<256x16xf32> -> vector<256x16xf32>
    %c0_15 = arith.constant 0 : index
    %c0_16 = arith.constant 0 : index
    %17 = vector.load %arg7[%c0_15, %c0_16] : memref<1x16xf32, #tpu.memory_space<vmem>>, vector<1x16xf32>
    %18 = vector.broadcast %17 : vector<1x16xf32> to vector<256x16xf32>
    %19 = arith.addf %16, %18 : vector<256x16xf32>
    %20 = vector.extract_strided_slice %19 {offsets = [0, 0], sizes = [256, 8], strides = [1, 1]} : vector<256x16xf32> to vector<256x8xf32>
    %c0_17 = arith.constant 0 : index
    %c0_18 = arith.constant 0 : index
    %21 = vector.load %arg8[%c0_17, %c0_18] : memref<256x8xf32, #tpu.memory_space<vmem>>, vector<256x8xf32>
    tpu.vector_store %arg8[%c0_17, %c0_18], %20 {strides = array<i32>} : memref<256x8xf32, #tpu.memory_space<vmem>>, vector<256x8xf32>,
    %22 = vector.extract_strided_slice %19 {offsets = [0, 8], sizes = [256, 8], strides = [1, 1]} : vector<256x16xf32> to vector<256x8xf32>
    %c0_19 = arith.constant 0 : index
    %c0_20 = arith.constant 0 : index
    %23 = vector.load %arg9[%c0_19, %c0_20] : memref<256x8xf32, #tpu.memory_space<vmem>>, vector<256x8xf32>
    tpu.vector_store %arg9[%c0_19, %c0_20], %22 {strides = array<i32>} : memref<256x8xf32, #tpu.memory_space<vmem>>, vector<256x8xf32>,
    return
  }
  func.func @transform_0(%arg0: i32) -> (i32, i32) {
    %c0_i32 = arith.constant 0 : i32
    %c0_i32_0 = arith.constant 0 : i32
    return %arg0, %c0_i32 : i32, i32
  }
  func.func @transform_1(%arg0: i32) -> (i32, i32) {
    %c0_i32 = arith.constant 0 : i32
    %c0_i32_0 = arith.constant 0 : i32
    %c0_i32_1 = arith.constant 0 : i32
    return %c0_i32, %c0_i32_0 : i32, i32
  }
  func.func @transform_2(%arg0: i32) -> (i32, i32) {
    %c0_i32 = arith.constant 0 : i32
    %c0_i32_0 = arith.constant 0 : i32
    %c0_i32_1 = arith.constant 0 : i32
    return %c0_i32, %c0_i32_0 : i32, i32
  }
  func.func @transform_3(%arg0: i32) -> (i32, i32) {
    %c0_i32 = arith.constant 0 : i32
    %c0_i32_0 = arith.constant 0 : i32
    %c0_i32_1 = arith.constant 0 : i32
    return %c0_i32, %c0_i32_0 : i32, i32
  }
  func.func @transform_4(%arg0: i32) -> (i32, i32) {
    %c0_i32 = arith.constant 0 : i32
    %c0_i32_0 = arith.constant 0 : i32
    %c0_i32_1 = arith.constant 0 : i32
    return %c0_i32, %c0_i32_0 : i32, i32
  }
  func.func @transform_5(%arg0: i32) -> (i32, i32) {
    %c0_i32 = arith.constant 0 : i32
    %c0_i32_0 = arith.constant 0 : i32
    %c0_i32_1 = arith.constant 0 : i32
    return %c0_i32, %c0_i32_0 : i32, i32
  }
  func.func @transform_6(%arg0: i32) -> (i32, i32) {
    %c0_i32 = arith.constant 0 : i32
    %c0_i32_0 = arith.constant 0 : i32
    %c0_i32_1 = arith.constant 0 : i32
    return %c0_i32, %c0_i32_0 : i32, i32
  }
  func.func @transform_7(%arg0: i32) -> (i32, i32) {
    %c0_i32 = arith.constant 0 : i32
    %c0_i32_0 = arith.constant 0 : i32
    return %arg0, %c0_i32 : i32, i32
  }
  func.func @transform_8(%arg0: i32) -> (i32, i32) {
    %c0_i32 = arith.constant 0 : i32
    %c0_i32_0 = arith.constant 0 : i32
    return %arg0, %c0_i32 : i32, i32
  }
}

</mosaic_0001>

<llo_original>
// kernel: encoder_forward.1
$region0: #{encoder_forward.1}
  #allocation0 [shape = 'u32[]', space=smem, size = 0x4, offset = 0x4, fixed_abs, tag = 'smem constant byte address 0x4 - core index']
  #allocation1 [shape = 'u32[144,128]{1,0:T(1,128)}', space=vmem, size = 0x12000, scoped, tag = 'internal scratch']
  %s0 = inlined_call_operand.vmem [shape: f32[256,16], index: 0, kind: input, shape index: {}]
  %s1 = inlined_call_operand.vmem [shape: f32[16,32], index: 1, kind: input, shape index: {}]
  %s2 = inlined_call_operand.vmem [shape: f32[1,32], index: 2, kind: input, shape index: {}]
  %s3 = inlined_call_operand.vmem [shape: f32[32,32], index: 3, kind: input, shape index: {}]
  %s4 = inlined_call_operand.vmem [shape: f32[1,32], index: 4, kind: input, shape index: {}]
  %s5 = inlined_call_operand.vmem [shape: f32[32,16], index: 5, kind: input, shape index: {}]
  %s6 = inlined_call_operand.vmem [shape: f32[1,16], index: 6, kind: input, shape index: {}]
  %s7 = inlined_call_operand.vmem [shape: f32[256,8], index: 7, kind: output, shape index: {0}]
  %s8 = inlined_call_operand.vmem [shape: f32[256,8], index: 8, kind: output, shape index: {1}]
  %9 = xla_tuple %s7, %s8
  %s10 = sld [smem:[#allocation0]]
  $region46: #{encoder_forward.1} parent=0
    _
  %s12 = ssub.s32 1, %s10
  %s13 = scalar_select 0, %s12, %s10
  // Predicated region
  $region2: #{encoder_forward.1} parent=0 // pred_check
    _
  $region3: #{encoder_forward.1} parent=0 // pred_check_branch
    %15 = sbr.rel (0) target = $region5
  $region4: #{encoder_forward.1} parent=0 // pred_region
    _
  $region5: #{encoder_forward.1} parent=0 // pred_fallthru
    _
  // Predicated region
  $region6: #{encoder_forward.1} parent=0 // pred_check
    _
  $region7: #{encoder_forward.1} parent=0 // pred_check_branch
    %17 = sbr.rel (0) target = $region9
  $region8: #{encoder_forward.1} parent=0 // pred_region
    _
  $region9: #{encoder_forward.1} parent=0 // pred_fallthru
    _
  // Predicated region
  $region10: #{encoder_forward.1} parent=0 // pred_check
    _
  $region11: #{encoder_forward.1} parent=0 // pred_check_branch
    %19 = sbr.rel (0) target = $region13
  $region12: #{encoder_forward.1} parent=0 // pred_region
    _
  $region13: #{encoder_forward.1} parent=0 // pred_fallthru
    _
  // Predicated region
  $region14: #{encoder_forward.1} parent=0 // pred_check
    _
  $region15: #{encoder_forward.1} parent=0 // pred_check_branch
    %21 = sbr.rel (0) target = $region17
  $region16: #{encoder_forward.1} parent=0 // pred_region
    _
  $region17: #{encoder_forward.1} parent=0 // pred_fallthru
    _
  // Predicated region
  $region18: #{encoder_forward.1} parent=0 // pred_check
    _
  $region19: #{encoder_forward.1} parent=0 // pred_check_branch
    %23 = sbr.rel (0) target = $region21
  $region20: #{encoder_forward.1} parent=0 // pred_region
    _
  $region21: #{encoder_forward.1} parent=0 // pred_fallthru
    _
  // Predicated region
  $region22: #{encoder_forward.1} parent=0 // pred_check
    _
  $region23: #{encoder_forward.1} parent=0 // pred_check_branch
    %25 = sbr.rel (0) target = $region25
  $region24: #{encoder_forward.1} parent=0 // pred_region
    _
  $region25: #{encoder_forward.1} parent=0 // pred_fallthru
    _
  // Predicated region
  $region26: #{encoder_forward.1} parent=0 // pred_check
    _
  $region27: #{encoder_forward.1} parent=0 // pred_check_branch
    %27 = sbr.rel (0) target = $region29
  $region28: #{encoder_forward.1} parent=0 // pred_region
    _
  $region29: #{encoder_forward.1} parent=0 // pred_fallthru
    _
  %v28 = vld [vmem:[%s0] sm:$0xff]
  %v29 = vld [vmem:[%s0 + $0x8] sm:$0xff]
  %v30 = vld [vmem:[%s0 + $0x10] sm:$0xff]
  %v31 = vld [vmem:[%s0 + $0x18] sm:$0xff]
  %v32 = vld [vmem:[%s0 + $0x20] sm:$0xff]
  %v33 = vld [vmem:[%s0 + $0x28] sm:$0xff]
  %v34 = vld [vmem:[%s0 + $0x30] sm:$0xff]
  %v35 = vld [vmem:[%s0 + $0x38] sm:$0xff]
  %v36 = vld [vmem:[%s0 + $0x40] sm:$0xff]
  %v37 = vld [vmem:[%s0 + $0x48] sm:$0xff]
  %v38 = vld [vmem:[%s0 + $0x50] sm:$0xff]
  %v39 = vld [vmem:[%s0 + $0x58] sm:$0xff]
  %v40 = vld [vmem:[%s0 + $0x60] sm:$0xff]
  %v41 = vld [vmem:[%s0 + $0x68] sm:$0xff]
  %v42 = vld [vmem:[%s0 + $0x70] sm:$0xff]
  %v43 = vld [vmem:[%s0 + $0x78] sm:$0xff]
  %v44 = vld [vmem:[%s0 + $0x80] sm:$0xff]
  %v45 = vld [vmem:[%s0 + $0x88] sm:$0xff]
  %v46 = vld [vmem:[%s0 + $0x90] sm:$0xff]
  %v47 = vld [vmem:[%s0 + $0x98] sm:$0xff]
  %v48 = vld [vmem:[%s0 + $0xa0] sm:$0xff]
  %v49 = vld [vmem:[%s0 + $0xa8] sm:$0xff]
  %v50 = vld [vmem:[%s0 + $0xb0] sm:$0xff]
  %v51 = vld [vmem:[%s0 + $0xb8] sm:$0xff]
  %v52 = vld [vmem:[%s0 + $0xc0] sm:$0xff]
  %v53 = vld [vmem:[%s0 + $0xc8] sm:$0xff]
  %v54 = vld [vmem:[%s0 + $0xd0] sm:$0xff]
  %v55 = vld [vmem:[%s0 + $0xd8] sm:$0xff]
  %v56 = vld [vmem:[%s0 + $0xe0] sm:$0xff]
  %v57 = vld [vmem:[%s0 + $0xe8] sm:$0xff]
  %v58 = vld [vmem:[%s0 + $0xf0] sm:$0xff]
  %v59 = vld [vmem:[%s0 + $0xf8] sm:$0xff]
  %v60 = vld [vmem:[%s1] sm:$0xff]
  %v61 = vld [vmem:[%s1 + $0x8] sm:$0xff]
  %v62 = vld [vmem:[%s2] sm:$0x1]
  %v64 = vlaneseq
  %v65 = vshrl.u32 %v64, 7
  %v66 = vsub.s32 0, %v65
  %v67 = vrot.slane %v62, %v66
  %vm69 = vcmask 130048
  %v71 = vsel %vm69, %v28, 0
  %v74 = vsel %vm69, %v29, 0
  %v77 = vsel %vm69, %v30, 0
  %v80 = vsel %vm69, %v31, 0
  %v83 = vsel %vm69, %v32, 0
  %v86 = vsel %vm69, %v33, 0
  %v89 = vsel %vm69, %v34, 0
  %v92 = vsel %vm69, %v35, 0
  %v95 = vsel %vm69, %v36, 0
  %v98 = vsel %vm69, %v37, 0
  %v101 = vsel %vm69, %v38, 0
  %v104 = vsel %vm69, %v39, 0
  %v107 = vsel %vm69, %v40, 0
  %v110 = vsel %vm69, %v41, 0
  %v113 = vsel %vm69, %v42, 0
  %v116 = vsel %vm69, %v43, 0
  %v119 = vsel %vm69, %v44, 0
  %v122 = vsel %vm69, %v45, 0
  %v125 = vsel %vm69, %v46, 0
  %v128 = vsel %vm69, %v47, 0
  %v131 = vsel %vm69, %v48, 0
  %v134 = vsel %vm69, %v49, 0
  %v137 = vsel %vm69, %v50, 0
  %v140 = vsel %vm69, %v51, 0
  %v143 = vsel %vm69, %v52, 0
  %v146 = vsel %vm69, %v53, 0
  %v149 = vsel %vm69, %v54, 0
  %v152 = vsel %vm69, %v55, 0
  %v155 = vsel %vm69, %v56, 0
  %v158 = vsel %vm69, %v57, 0
  %v161 = vsel %vm69, %v58, 0
  %v164 = vsel %vm69, %v59, 0
  %166 = vmatprep.subr.mxu0 0.0
  %167 = vmatpush1.msra.mxu0 0.0
  %168 = vmatprep.subr.mxu0 0.0
  %169 = vmatpush1.msra.mxu0 0.0
  %170 = vmatprep.subr.mxu0 0.0
  %171 = vmatpush1.msra.mxu0 0.0
  %172 = vmatprep.subr.mxu0 0.0
  %173 = vmatpush1.msra.mxu0 0.0
  %174 = vmatprep.subr.mxu0 0.0
  %175 = vmatpush1.msra.mxu0 0.0
  %176 = vmatprep.subr.mxu0 0.0
  %177 = vmatpush1.msra.mxu0 0.0
  %178 = vmatprep.subr.mxu0 0.0
  %179 = vmatpush1.msra.mxu0 0.0
  %180 = vmatprep.subr.mxu0 0.0
  %181 = vmatpush1.msra.mxu0 0.0
  %182 = vmatprep.subr.mxu0 0.0
  %183 = vmatpush1.msra.mxu0 0.0
  %184 = vmatprep.subr.mxu0 0.0
  %185 = vmatpush1.msra.mxu0 0.0
  %186 = vmatprep.subr.mxu0 0.0
  %187 = vmatpush1.msra.mxu0 0.0
  %188 = vmatprep.subr.mxu0 0.0
  %189 = vmatpush1.msra.mxu0 0.0
  %190 = vmatprep.subr.mxu0 0.0
  %191 = vmatpush1.msra.mxu0 0.0
  %192 = vmatprep.subr.mxu0 0.0
  %193 = vmatpush1.msra.mxu0 0.0
  %194 = vmatprep.subr.mxu0 0.0
  %195 = vmatpush1.msra.mxu0 %v61
  %196 = vmatprep.subr.mxu0 0.0
  %197 = vmatpush1.msra.mxu0 %v60
  %198 = vmatprep.subr.mxu0 0.0
  %199 = vmatpush2.msra.mxu0 0.0
  %200 = vmatprep.subr.mxu0 0.0
  %201 = vmatpush2.msra.mxu0 0.0
  %202 = vmatprep.subr.mxu0 0.0
  %203 = vmatpush2.msra.mxu0 0.0
  %204 = vmatprep.subr.mxu0 0.0
  %205 = vmatpush2.msra.mxu0 0.0
  %206 = vmatprep.subr.mxu0 0.0
  %207 = vmatpush2.msra.mxu0 0.0
  %208 = vmatprep.subr.mxu0 0.0
  %209 = vmatpush2.msra.mxu0 0.0
  %210 = vmatprep.subr.mxu0 0.0
  %211 = vmatpush2.msra.mxu0 0.0
  %212 = vmatprep.subr.mxu0 0.0
  %213 = vmatpush2.msra.mxu0 0.0
  %214 = vmatprep.subr.mxu0 0.0
  %215 = vmatpush2.msra.mxu0 0.0
  %216 = vmatprep.subr.mxu0 0.0
  %217 = vmatpush2.msra.mxu0 0.0
  %218 = vmatprep.subr.mxu0 0.0
  %219 = vmatpush2.msra.mxu0 0.0
  %220 = vmatprep.subr.mxu0 0.0
  %221 = vmatpush2.msra.mxu0 0.0
  %222 = vmatprep.subr.mxu0 0.0
  %223 = vmatpush2.msra.mxu0 0.0
  %224 = vmatprep.subr.mxu0 0.0
  %225 = vmatpush2.msra.mxu0 0.0
  %226 = vmatprep.subr.mxu0 0.0
  %227 = vmatpush2.msra.mxu0 0.0
  %228 = vmatprep.subr.mxu0 0.0
  %229 = vmatpush2.msra.mxu0 0.0
  %230 = vmatprep.mubr.f32.mxu0 0.0
  %231 = vmatmul.mubr.f32.gmra.mxu0 %v71
  %v232 = vpop.f32.mrf.mxu0
  %v233 = vadd.f32 %v67, %v232
  %v234 = vpop.f32.mrf.mxu0
  %235 = vmatprep.mubr.f32.mxu0 0.0
  %236 = vmatmul.mubr.f32.gmra.mxu0 %v74
  %v237 = vpop.f32.mrf.mxu0
  %v238 = vadd.f32 %v67, %v237
  %v239 = vpop.f32.mrf.mxu0
  %240 = vmatprep.mubr.f32.mxu0 0.0
  %241 = vmatmul.mubr.f32.gmra.mxu0 %v77
  %v242 = vpop.f32.mrf.mxu0
  %v243 = vadd.f32 %v67, %v242
  %v244 = vpop.f32.mrf.mxu0
  %245 = vmatprep.mubr.f32.mxu0 0.0
  %246 = vmatmul.mubr.f32.gmra.mxu0 %v80
  %v247 = vpop.f32.mrf.mxu0
  %v248 = vadd.f32 %v67, %v247
  %v249 = vpop.f32.mrf.mxu0
  %250 = vmatprep.mubr.f32.mxu0 0.0
  %251 = vmatmul.mubr.f32.gmra.mxu0 %v83
  %v252 = vpop.f32.mrf.mxu0
  %v253 = vadd.f32 %v67, %v252
  %v254 = vpop.f32.mrf.mxu0
  %255 = vmatprep.mubr.f32.mxu0 0.0
  %256 = vmatmul.mubr.f32.gmra.mxu0 %v86
  %v257 = vpop.f32.mrf.mxu0
  %v258 = vadd.f32 %v67, %v257
  %v259 = vpop.f32.mrf.mxu0
  %260 = vmatprep.mubr.f32.mxu0 0.0
  %261 = vmatmul.mubr.f32.gmra.mxu0 %v89
  %v262 = vpop.f32.mrf.mxu0
  %v263 = vadd.f32 %v67, %v262
  %v264 = vpop.f32.mrf.mxu0
  %265 = vmatprep.mubr.f32.mxu0 0.0
  %266 = vmatmul.mubr.f32.gmra.mxu0 %v92
  %v267 = vpop.f32.mrf.mxu0
  %v268 = vadd.f32 %v67, %v267
  %v269 = vpop.f32.mrf.mxu0
  %270 = vmatprep.mubr.f32.mxu0 0.0
  %271 = vmatmul.mubr.f32.gmra.mxu0 %v95
  %v272 = vpop.f32.mrf.mxu0
  %v273 = vadd.f32 %v67, %v272
  %v274 = vpop.f32.mrf.mxu0
  %275 = vmatprep.mubr.f32.mxu0 0.0
  %276 = vmatmul.mubr.f32.gmra.mxu0 %v98
  %v277 = vpop.f32.mrf.mxu0
  %v278 = vadd.f32 %v67, %v277
  %v279 = vpop.f32.mrf.mxu0
  %280 = vmatprep.mubr.f32.mxu0 0.0
  %281 = vmatmul.mubr.f32.gmra.mxu0 %v101
  %v282 = vpop.f32.mrf.mxu0
  %v283 = vadd.f32 %v67, %v282
  %v284 = vpop.f32.mrf.mxu0
  %285 = vmatprep.mubr.f32.mxu0 0.0
  %286 = vmatmul.mubr.f32.gmra.mxu0 %v104
  %v287 = vpop.f32.mrf.mxu0
  %v288 = vadd.f32 %v67, %v287
  %v289 = vpop.f32.mrf.mxu0
  %290 = vmatprep.mubr.f32.mxu0 0.0
  %291 = vmatmul.mubr.f32.gmra.mxu0 %v107
  %v292 = vpop.f32.mrf.mxu0
  %v293 = vadd.f32 %v67, %v292
  %v294 = vpop.f32.mrf.mxu0
  %295 = vmatprep.mubr.f32.mxu0 0.0
  %296 = vmatmul.mubr.f32.gmra.mxu0 %v110
  %v297 = vpop.f32.mrf.mxu0
  %v298 = vadd.f32 %v67, %v297
  %v299 = vpop.f32.mrf.mxu0
  %300 = vmatprep.mubr.f32.mxu0 0.0
  %301 = vmatmul.mubr.f32.gmra.mxu0 %v113
  %v302 = vpop.f32.mrf.mxu0
  %v303 = vadd.f32 %v67, %v302
  %v304 = vpop.f32.mrf.mxu0
  %305 = vmatprep.mubr.f32.mxu0 0.0
  %306 = vmatmul.mubr.f32.gmra.mxu0 %v116
  %v307 = vpop.f32.mrf.mxu0
  %v308 = vadd.f32 %v67, %v307
  %v309 = vpop.f32.mrf.mxu0
  %310 = vmatprep.mubr.f32.mxu0 0.0
  %311 = vmatmul.mubr.f32.gmra.mxu0 %v119
  %v312 = vpop.f32.mrf.mxu0
  %v313 = vadd.f32 %v67, %v312
  %v314 = vpop.f32.mrf.mxu0
  %315 = vmatprep.mubr.f32.mxu0 0.0
  %316 = vmatmul.mubr.f32.gmra.mxu0 %v122
  %v317 = vpop.f32.mrf.mxu0
  %v318 = vadd.f32 %v67, %v317
  %v319 = vpop.f32.mrf.mxu0
  %320 = vmatprep.mubr.f32.mxu0 0.0
  %321 = vmatmul.mubr.f32.gmra.mxu0 %v125
  %v322 = vpop.f32.mrf.mxu0
  %v323 = vadd.f32 %v67, %v322
  %v324 = vpop.f32.mrf.mxu0
  %325 = vmatprep.mubr.f32.mxu0 0.0
  %326 = vmatmul.mubr.f32.gmra.mxu0 %v128
  %v327 = vpop.f32.mrf.mxu0
  %v328 = vadd.f32 %v67, %v327
  %v329 = vpop.f32.mrf.mxu0
  %330 = vmatprep.mubr.f32.mxu0 0.0
  %331 = vmatmul.mubr.f32.gmra.mxu0 %v131
  %v332 = vpop.f32.mrf.mxu0
  %v333 = vadd.f32 %v67, %v332
  %v334 = vpop.f32.mrf.mxu0
  %335 = vmatprep.mubr.f32.mxu0 0.0
  %336 = vmatmul.mubr.f32.gmra.mxu0 %v134
  %v337 = vpop.f32.mrf.mxu0
  %v338 = vadd.f32 %v67, %v337
  %v339 = vpop.f32.mrf.mxu0
  %340 = vmatprep.mubr.f32.mxu0 0.0
  %341 = vmatmul.mubr.f32.gmra.mxu0 %v137
  %v342 = vpop.f32.mrf.mxu0
  %v343 = vadd.f32 %v67, %v342
  %v344 = vpop.f32.mrf.mxu0
  %345 = vmatprep.mubr.f32.mxu0 0.0
  %346 = vmatmul.mubr.f32.gmra.mxu0 %v140
  %v347 = vpop.f32.mrf.mxu0
  %v348 = vadd.f32 %v67, %v347
  %v349 = vpop.f32.mrf.mxu0
  %350 = vmatprep.mubr.f32.mxu0 0.0
  %351 = vmatmul.mubr.f32.gmra.mxu0 %v143
  %v352 = vpop.f32.mrf.mxu0
  %v353 = vadd.f32 %v67, %v352
  %v354 = vpop.f32.mrf.mxu0
  %355 = vmatprep.mubr.f32.mxu0 0.0
  %356 = vmatmul.mubr.f32.gmra.mxu0 %v146
  %v357 = vpop.f32.mrf.mxu0
  %v358 = vadd.f32 %v67, %v357
  %v359 = vpop.f32.mrf.mxu0
  %360 = vmatprep.mubr.f32.mxu0 0.0
  %361 = vmatmul.mubr.f32.gmra.mxu0 %v149
  %v362 = vpop.f32.mrf.mxu0
  %v363 = vadd.f32 %v67, %v362
  %v364 = vpop.f32.mrf.mxu0
  %365 = vmatprep.mubr.f32.mxu0 0.0
  %366 = vmatmul.mubr.f32.gmra.mxu0 %v152
  %v367 = vpop.f32.mrf.mxu0
  %v368 = vadd.f32 %v67, %v367
  %v369 = vpop.f32.mrf.mxu0
  %370 = vmatprep.mubr.f32.mxu0 0.0
  %371 = vmatmul.mubr.f32.gmra.mxu0 %v155
  %v372 = vpop.f32.mrf.mxu0
  %v373 = vadd.f32 %v67, %v372
  %v374 = vpop.f32.mrf.mxu0
  %375 = vmatprep.mubr.f32.mxu0 0.0
  %376 = vmatmul.mubr.f32.gmra.mxu0 %v158
  %v377 = vpop.f32.mrf.mxu0
  %v378 = vadd.f32 %v67, %v377
  %v379 = vpop.f32.mrf.mxu0
  %380 = vmatprep.mubr.f32.mxu0 0.0
  %381 = vmatmul.mubr.f32.gmra.mxu0 %v161
  %v382 = vpop.f32.mrf.mxu0
  %v383 = vadd.f32 %v67, %v382
  %v384 = vpop.f32.mrf.mxu0
  %385 = vmatprep.mubr.f32.mxu0 0.0
  %386 = vmatmul.mubr.f32.gmra.mxu0 %v164
  %v387 = vpop.f32.mrf.mxu0
  %v388 = vadd.f32 %v67, %v387
  %v389 = vpop.f32.mrf.mxu0
  %390 = vdwg.mxu0
  %v391 = vmax.f32 %v233, 0.0
  %v392 = vmax.f32 %v238, 0.0
  %v393 = vmax.f32 %v243, 0.0
  %v394 = vmax.f32 %v248, 0.0
  %v395 = vmax.f32 %v253, 0.0
  %v396 = vmax.f32 %v258, 0.0
  %v397 = vmax.f32 %v263, 0.0
  %v398 = vmax.f32 %v268, 0.0
  %v399 = vmax.f32 %v273, 0.0
  %v400 = vmax.f32 %v278, 0.0
  %v401 = vmax.f32 %v283, 0.0
  %v402 = vmax.f32 %v288, 0.0
  %v403 = vmax.f32 %v293, 0.0
  %v404 = vmax.f32 %v298, 0.0
  %v405 = vmax.f32 %v303, 0.0
  %v406 = vmax.f32 %v308, 0.0
  %v407 = vmax.f32 %v313, 0.0
  %v408 = vmax.f32 %v318, 0.0
  %v409 = vmax.f32 %v323, 0.0
  %v410 = vmax.f32 %v328, 0.0
  %v411 = vmax.f32 %v333, 0.0
  %v412 = vmax.f32 %v338, 0.0
  %v413 = vmax.f32 %v343, 0.0
  %v414 = vmax.f32 %v348, 0.0
  %v415 = vmax.f32 %v353, 0.0
  %v416 = vmax.f32 %v358, 0.0
  %v417 = vmax.f32 %v363, 0.0
  %v418 = vmax.f32 %v368, 0.0
  %v419 = vmax.f32 %v373, 0.0
  %v420 = vmax.f32 %v378, 0.0
  %v421 = vmax.f32 %v383, 0.0
  %v422 = vmax.f32 %v388, 0.0
  %v423 = vld [vmem:[%s3] sm:$0xff]
  %v424 = vld [vmem:[%s3 + $0x8] sm:$0xff]
  %v425 = vld [vmem:[%s3 + $0x10] sm:$0xff]
  %v426 = vld [vmem:[%s3 + $0x18] sm:$0xff]
  %v427 = vld [vmem:[%s4] sm:$0x1]
  %v429 = vlaneseq
  %v430 = vshrl.u32 %v429, 7
  %v431 = vsub.s32 0, %v430
  %v432 = vrot.slane %v427, %v431
  %vm434 = vcmask 261120
  %v436 = vsel %vm434, %v391, 0
  %v439 = vsel %vm434, %v392, 0
  %v442 = vsel %vm434, %v393, 0
  %v445 = vsel %vm434, %v394, 0
  %v448 = vsel %vm434, %v395, 0
  %v451 = vsel %vm434, %v396, 0
  %v454 = vsel %vm434, %v397, 0
  %v457 = vsel %vm434, %v398, 0
  %v460 = vsel %vm434, %v399, 0
  %v463 = vsel %vm434, %v400, 0
  %v466 = vsel %vm434, %v401, 0
  %v469 = vsel %vm434, %v402, 0
  %v472 = vsel %vm434, %v403, 0
  %v475 = vsel %vm434, %v404, 0
  %v478 = vsel %vm434, %v405, 0
  %v481 = vsel %vm434, %v406, 0
  %v484 = vsel %vm434, %v407, 0
  %v487 = vsel %vm434, %v408, 0
  %v490 = vsel %vm434, %v409, 0
  %v493 = vsel %vm434, %v410, 0
  %v496 = vsel %vm434, %v411, 0
  %v499 = vsel %vm434, %v412, 0
  %v502 = vsel %vm434, %v413, 0
  %v505 = vsel %vm434, %v414, 0
  %v508 = vsel %vm434, %v415, 0
  %v511 = vsel %vm434, %v416, 0
  %v514 = vsel %vm434, %v417, 0
  %v517 = vsel %vm434, %v418, 0
  %v520 = vsel %vm434, %v419, 0
  %v523 = vsel %vm434, %v420, 0
  %v526 = vsel %vm434, %v421, 0
  %v529 = vsel %vm434, %v422, 0
  %531 = vmatprep.subr.mxu0 0.0
  %532 = vmatpush1.msra.mxu0 0.0
  %533 = vmatprep.subr.mxu0 0.0
  %534 = vmatpush1.msra.mxu0 0.0
  %535 = vmatprep.subr.mxu0 0.0
  %536 = vmatpush1.msra.mxu0 0.0
  %537 = vmatprep.subr.mxu0 0.0
  %538 = vmatpush1.msra.mxu0 0.0
  %539 = vmatprep.subr.mxu0 0.0
  %540 = vmatpush1.msra.mxu0 0.0
  %541 = vmatprep.subr.mxu0 0.0
  %542 = vmatpush1.msra.mxu0 0.0
  %543 = vmatprep.subr.mxu0 0.0
  %544 = vmatpush1.msra.mxu0 0.0
  %545 = vmatprep.subr.mxu0 0.0
  %546 = vmatpush1.msra.mxu0 0.0
  %547 = vmatprep.subr.mxu0 0.0
  %548 = vmatpush1.msra.mxu0 0.0
  %549 = vmatprep.subr.mxu0 0.0
  %550 = vmatpush1.msra.mxu0 0.0
  %551 = vmatprep.subr.mxu0 0.0
  %552 = vmatpush1.msra.mxu0 0.0
  %553 = vmatprep.subr.mxu0 0.0
  %554 = vmatpush1.msra.mxu0 0.0
  %555 = vmatprep.subr.mxu0 0.0
  %556 = vmatpush1.msra.mxu0 %v426
  %557 = vmatprep.subr.mxu0 0.0
  %558 = vmatpush1.msra.mxu0 %v425
  %559 = vmatprep.subr.mxu0 0.0
  %560 = vmatpush1.msra.mxu0 %v424
  %561 = vmatprep.subr.mxu0 0.0
  %562 = vmatpush1.msra.mxu0 %v423
  %563 = vmatprep.subr.mxu0 0.0
  %564 = vmatpush2.msra.mxu0 0.0
  %565 = vmatprep.subr.mxu0 0.0
  %566 = vmatpush2.msra.mxu0 0.0
  %567 = vmatprep.subr.mxu0 0.0
  %568 = vmatpush2.msra.mxu0 0.0
  %569 = vmatprep.subr.mxu0 0.0
  %570 = vmatpush2.msra.mxu0 0.0
  %571 = vmatprep.subr.mxu0 0.0
  %572 = vmatpush2.msra.mxu0 0.0
  %573 = vmatprep.subr.mxu0 0.0
  %574 = vmatpush2.msra.mxu0 0.0
  %575 = vmatprep.subr.mxu0 0.0
  %576 = vmatpush2.msra.mxu0 0.0
  %577 = vmatprep.subr.mxu0 0.0
  %578 = vmatpush2.msra.mxu0 0.0
  %579 = vmatprep.subr.mxu0 0.0
  %580 = vmatpush2.msra.mxu0 0.0
  %581 = vmatprep.subr.mxu0 0.0
  %582 = vmatpush2.msra.mxu0 0.0
  %583 = vmatprep.subr.mxu0 0.0
  %584 = vmatpush2.msra.mxu0 0.0
  %585 = vmatprep.subr.mxu0 0.0
  %586 = vmatpush2.msra.mxu0 0.0
  %587 = vmatprep.subr.mxu0 0.0
  %588 = vmatpush2.msra.mxu0 0.0
  %589 = vmatprep.subr.mxu0 0.0
  %590 = vmatpush2.msra.mxu0 0.0
  %591 = vmatprep.subr.mxu0 0.0
  %592 = vmatpush2.msra.mxu0 0.0
  %593 = vmatprep.subr.mxu0 0.0
  %594 = vmatpush2.msra.mxu0 0.0
  %595 = vmatprep.mubr.f32.mxu0 0.0
  %596 = vmatmul.mubr.f32.gmra.mxu0 %v436
  %v597 = vpop.f32.mrf.mxu0
  %v598 = vadd.f32 %v432, %v597
  %v599 = vpop.f32.mrf.mxu0
  %600 = vmatprep.mubr.f32.mxu0 0.0
  %601 = vmatmul.mubr.f32.gmra.mxu0 %v439
  %v602 = vpop.f32.mrf.mxu0
  %v603 = vadd.f32 %v432, %v602
  %v604 = vpop.f32.mrf.mxu0
  %605 = vmatprep.mubr.f32.mxu0 0.0
  %606 = vmatmul.mubr.f32.gmra.mxu0 %v442
  %v607 = vpop.f32.mrf.mxu0
  %v608 = vadd.f32 %v432, %v607
  %v609 = vpop.f32.mrf.mxu0
  %610 = vmatprep.mubr.f32.mxu0 0.0
  %611 = vmatmul.mubr.f32.gmra.mxu0 %v445
  %v612 = vpop.f32.mrf.mxu0
  %v613 = vadd.f32 %v432, %v612
  %v614 = vpop.f32.mrf.mxu0
  %615 = vmatprep.mubr.f32.mxu0 0.0
  %616 = vmatmul.mubr.f32.gmra.mxu0 %v448
  %v617 = vpop.f32.mrf.mxu0
  %v618 = vadd.f32 %v432, %v617
  %v619 = vpop.f32.mrf.mxu0
  %620 = vmatprep.mubr.f32.mxu0 0.0
  %621 = vmatmul.mubr.f32.gmra.mxu0 %v451
  %v622 = vpop.f32.mrf.mxu0
  %v623 = vadd.f32 %v432, %v622
  %v624 = vpop.f32.mrf.mxu0
  %625 = vmatprep.mubr.f32.mxu0 0.0
  %626 = vmatmul.mubr.f32.gmra.mxu0 %v454
  %v627 = vpop.f32.mrf.mxu0
  %v628 = vadd.f32 %v432, %v627
  %v629 = vpop.f32.mrf.mxu0
  %630 = vmatprep.mubr.f32.mxu0 0.0
  %631 = vmatmul.mubr.f32.gmra.mxu0 %v457
  %v632 = vpop.f32.mrf.mxu0
  %v633 = vadd.f32 %v432, %v632
  %v634 = vpop.f32.mrf.mxu0
  %635 = vmatprep.mubr.f32.mxu0 0.0
  %636 = vmatmul.mubr.f32.gmra.mxu0 %v460
  %v637 = vpop.f32.mrf.mxu0
  %v638 = vadd.f32 %v432, %v637
  %v639 = vpop.f32.mrf.mxu0
  %640 = vmatprep.mubr.f32.mxu0 0.0
  %641 = vmatmul.mubr.f32.gmra.mxu0 %v463
  %v642 = vpop.f32.mrf.mxu0
  %v643 = vadd.f32 %v432, %v642
  %v644 = vpop.f32.mrf.mxu0
  %645 = vmatprep.mubr.f32.mxu0 0.0
  %646 = vmatmul.mubr.f32.gmra.mxu0 %v466
  %v647 = vpop.f32.mrf.mxu0
  %v648 = vadd.f32 %v432, %v647
  %v649 = vpop.f32.mrf.mxu0
  %650 = vmatprep.mubr.f32.mxu0 0.0
  %651 = vmatmul.mubr.f32.gmra.mxu0 %v469
  %v652 = vpop.f32.mrf.mxu0
  %v653 = vadd.f32 %v432, %v652
  %v654 = vpop.f32.mrf.mxu0
  %655 = vmatprep.mubr.f32.mxu0 0.0
  %656 = vmatmul.mubr.f32.gmra.mxu0 %v472
  %v657 = vpop.f32.mrf.mxu0
  %v658 = vadd.f32 %v432, %v657
  %v659 = vpop.f32.mrf.mxu0
  %660 = vmatprep.mubr.f32.mxu0 0.0
  %661 = vmatmul.mubr.f32.gmra.mxu0 %v475
  %v662 = vpop.f32.mrf.mxu0
  %v663 = vadd.f32 %v432, %v662
  %v664 = vpop.f32.mrf.mxu0
  %665 = vmatprep.mubr.f32.mxu0 0.0
  %666 = vmatmul.mubr.f32.gmra.mxu0 %v478
  %v667 = vpop.f32.mrf.mxu0
  %v668 = vadd.f32 %v432, %v667
  %v669 = vpop.f32.mrf.mxu0
  %670 = vmatprep.mubr.f32.mxu0 0.0
  %671 = vmatmul.mubr.f32.gmra.mxu0 %v481
  %v672 = vpop.f32.mrf.mxu0
  %v673 = vadd.f32 %v432, %v672
  %v674 = vpop.f32.mrf.mxu0
  %675 = vmatprep.mubr.f32.mxu0 0.0
  %676 = vmatmul.mubr.f32.gmra.mxu0 %v484
  %v677 = vpop.f32.mrf.mxu0
  %v678 = vadd.f32 %v432, %v677
  %v679 = vpop.f32.mrf.mxu0
  %680 = vmatprep.mubr.f32.mxu0 0.0
  %681 = vmatmul.mubr.f32.gmra.mxu0 %v487
  %v682 = vpop.f32.mrf.mxu0
  %v683 = vadd.f32 %v432, %v682
  %v684 = vpop.f32.mrf.mxu0
  %685 = vmatprep.mubr.f32.mxu0 0.0
  %686 = vmatmul.mubr.f32.gmra.mxu0 %v490
  %v687 = vpop.f32.mrf.mxu0
  %v688 = vadd.f32 %v432, %v687
  %v689 = vpop.f32.mrf.mxu0
  %690 = vmatprep.mubr.f32.mxu0 0.0
  %691 = vmatmul.mubr.f32.gmra.mxu0 %v493
  %v692 = vpop.f32.mrf.mxu0
  %v693 = vadd.f32 %v432, %v692
  %v694 = vpop.f32.mrf.mxu0
  %695 = vmatprep.mubr.f32.mxu0 0.0
  %696 = vmatmul.mubr.f32.gmra.mxu0 %v496
  %v697 = vpop.f32.mrf.mxu0
  %v698 = vadd.f32 %v432, %v697
  %v699 = vpop.f32.mrf.mxu0
  %700 = vmatprep.mubr.f32.mxu0 0.0
  %701 = vmatmul.mubr.f32.gmra.mxu0 %v499
  %v702 = vpop.f32.mrf.mxu0
  %v703 = vadd.f32 %v432, %v702
  %v704 = vpop.f32.mrf.mxu0
  %705 = vmatprep.mubr.f32.mxu0 0.0
  %706 = vmatmul.mubr.f32.gmra.mxu0 %v502
  %v707 = vpop.f32.mrf.mxu0
  %v708 = vadd.f32 %v432, %v707
  %v709 = vpop.f32.mrf.mxu0
  %710 = vmatprep.mubr.f32.mxu0 0.0
  %711 = vmatmul.mubr.f32.gmra.mxu0 %v505
  %v712 = vpop.f32.mrf.mxu0
  %v713 = vadd.f32 %v432, %v712
  %v714 = vpop.f32.mrf.mxu0
  %715 = vmatprep.mubr.f32.mxu0 0.0
  %716 = vmatmul.mubr.f32.gmra.mxu0 %v508
  %v717 = vpop.f32.mrf.mxu0
  %v718 = vadd.f32 %v432, %v717
  %v719 = vpop.f32.mrf.mxu0
  %720 = vmatprep.mubr.f32.mxu0 0.0
  %721 = vmatmul.mubr.f32.gmra.mxu0 %v511
  %v722 = vpop.f32.mrf.mxu0
  %v723 = vadd.f32 %v432, %v722
  %v724 = vpop.f32.mrf.mxu0
  %725 = vmatprep.mubr.f32.mxu0 0.0
  %726 = vmatmul.mubr.f32.gmra.mxu0 %v514
  %v727 = vpop.f32.mrf.mxu0
  %v728 = vadd.f32 %v432, %v727
  %v729 = vpop.f32.mrf.mxu0
  %730 = vmatprep.mubr.f32.mxu0 0.0
  %731 = vmatmul.mubr.f32.gmra.mxu0 %v517
  %v732 = vpop.f32.mrf.mxu0
  %v733 = vadd.f32 %v432, %v732
  %v734 = vpop.f32.mrf.mxu0
  %735 = vmatprep.mubr.f32.mxu0 0.0
  %736 = vmatmul.mubr.f32.gmra.mxu0 %v520
  %v737 = vpop.f32.mrf.mxu0
  %v738 = vadd.f32 %v432, %v737
  %v739 = vpop.f32.mrf.mxu0
  %740 = vmatprep.mubr.f32.mxu0 0.0
  %741 = vmatmul.mubr.f32.gmra.mxu0 %v523
  %v742 = vpop.f32.mrf.mxu0
  %v743 = vadd.f32 %v432, %v742
  %v744 = vpop.f32.mrf.mxu0
  %745 = vmatprep.mubr.f32.mxu0 0.0
  %746 = vmatmul.mubr.f32.gmra.mxu0 %v526
  %v747 = vpop.f32.mrf.mxu0
  %v748 = vadd.f32 %v432, %v747
  %v749 = vpop.f32.mrf.mxu0
  %750 = vmatprep.mubr.f32.mxu0 0.0
  %751 = vmatmul.mubr.f32.gmra.mxu0 %v529
  %v752 = vpop.f32.mrf.mxu0
  %v753 = vadd.f32 %v432, %v752
  %v754 = vpop.f32.mrf.mxu0
  %755 = vdwg.mxu0
  %v756 = vmax.f32 %v598, 0.0
  %v757 = vmax.f32 %v603, 0.0
  %v758 = vmax.f32 %v608, 0.0
  %v759 = vmax.f32 %v613, 0.0
  %v760 = vmax.f32 %v618, 0.0
  %v761 = vmax.f32 %v623, 0.0
  %v762 = vmax.f32 %v628, 0.0
  %v763 = vmax.f32 %v633, 0.0
  %v764 = vmax.f32 %v638, 0.0
  %v765 = vmax.f32 %v643, 0.0
  %v766 = vmax.f32 %v648, 0.0
  %v767 = vmax.f32 %v653, 0.0
  %v768 = vmax.f32 %v658, 0.0
  %v769 = vmax.f32 %v663, 0.0
  %v770 = vmax.f32 %v668, 0.0
  %v771 = vmax.f32 %v673, 0.0
  %v772 = vmax.f32 %v678, 0.0
  %v773 = vmax.f32 %v683, 0.0
  %v774 = vmax.f32 %v688, 0.0
  %v775 = vmax.f32 %v693, 0.0
  %v776 = vmax.f32 %v698, 0.0
  %v777 = vmax.f32 %v703, 0.0
  %v778 = vmax.f32 %v708, 0.0
  %v779 = vmax.f32 %v713, 0.0
  %v780 = vmax.f32 %v718, 0.0
  %v781 = vmax.f32 %v723, 0.0
  %v782 = vmax.f32 %v728, 0.0
  %v783 = vmax.f32 %v733, 0.0
  %v784 = vmax.f32 %v738, 0.0
  %v785 = vmax.f32 %v743, 0.0
  %v786 = vmax.f32 %v748, 0.0
  %v787 = vmax.f32 %v753, 0.0
  %v788 = vld [vmem:[%s5] sm:$0xff]
  %v789 = vld [vmem:[%s5 + $0x8] sm:$0xff]
  %v790 = vld [vmem:[%s5 + $0x10] sm:$0xff]
  %v791 = vld [vmem:[%s5 + $0x18] sm:$0xff]
  %v792 = vld [vmem:[%s6] sm:$0x1]
  %v794 = vlaneseq
  %v795 = vshrl.u32 %v794, 7
  %v796 = vsub.s32 0, %v795
  %v797 = vrot.slane %v792, %v796
  %v800 = vsel %vm434, %v756, 0
  %v803 = vsel %vm434, %v757, 0
  %v806 = vsel %vm434, %v758, 0
  %v809 = vsel %vm434, %v759, 0
  %v812 = vsel %vm434, %v760, 0
  %v815 = vsel %vm434, %v761, 0
  %v818 = vsel %vm434, %v762, 0
  %v821 = vsel %vm434, %v763, 0
  %v824 = vsel %vm434, %v764, 0
  %v827 = vsel %vm434, %v765, 0
  %v830 = vsel %vm434, %v766, 0
  %v833 = vsel %vm434, %v767, 0
  %v836 = vsel %vm434, %v768, 0
  %v839 = vsel %vm434, %v769, 0
  %v842 = vsel %vm434, %v770, 0
  %v845 = vsel %vm434, %v771, 0
  %v848 = vsel %vm434, %v772, 0
  %v851 = vsel %vm434, %v773, 0
  %v854 = vsel %vm434, %v774, 0
  %v857 = vsel %vm434, %v775, 0
  %v860 = vsel %vm434, %v776, 0
  %v863 = vsel %vm434, %v777, 0
  %v866 = vsel %vm434, %v778, 0
  %v869 = vsel %vm434, %v779, 0
  %v872 = vsel %vm434, %v780, 0
  %v875 = vsel %vm434, %v781, 0
  %v878 = vsel %vm434, %v782, 0
  %v881 = vsel %vm434, %v783, 0
  %v884 = vsel %vm434, %v784, 0
  %v887 = vsel %vm434, %v785, 0
  %v890 = vsel %vm434, %v786, 0
  %v893 = vsel %vm434, %v787, 0
  %895 = vmatprep.subr.mxu0 0.0
  %896 = vmatpush1.msra.mxu0 0.0
  %897 = vmatprep.subr.mxu0 0.0
  %898 = vmatpush1.msra.mxu0 0.0
  %899 = vmatprep.subr.mxu0 0.0
  %900 = vmatpush1.msra.mxu0 0.0
  %901 = vmatprep.subr.mxu0 0.0
  %902 = vmatpush1.msra.mxu0 0.0
  %903 = vmatprep.subr.mxu0 0.0
  %904 = vmatpush1.msra.mxu0 0.0
  %905 = vmatprep.subr.mxu0 0.0
  %906 = vmatpush1.msra.mxu0 0.0
  %907 = vmatprep.subr.mxu0 0.0
  %908 = vmatpush1.msra.mxu0 0.0
  %909 = vmatprep.subr.mxu0 0.0
  %910 = vmatpush1.msra.mxu0 0.0
  %911 = vmatprep.subr.mxu0 0.0
  %912 = vmatpush1.msra.mxu0 0.0
  %913 = vmatprep.subr.mxu0 0.0
  %914 = vmatpush1.msra.mxu0 0.0
  %915 = vmatprep.subr.mxu0 0.0
  %916 = vmatpush1.msra.mxu0 0.0
  %917 = vmatprep.subr.mxu0 0.0
  %918 = vmatpush1.msra.mxu0 0.0
  %919 = vmatprep.subr.mxu0 0.0
  %920 = vmatpush1.msra.mxu0 %v791
  %921 = vmatprep.subr.mxu0 0.0
  %922 = vmatpush1.msra.mxu0 %v790
  %923 = vmatprep.subr.mxu0 0.0
  %924 = vmatpush1.msra.mxu0 %v789
  %925 = vmatprep.subr.mxu0 0.0
  %926 = vmatpush1.msra.mxu0 %v788
  %927 = vmatprep.subr.mxu0 0.0
  %928 = vmatpush2.msra.mxu0 0.0
  %929 = vmatprep.subr.mxu0 0.0
  %930 = vmatpush2.msra.mxu0 0.0
  %931 = vmatprep.subr.mxu0 0.0
  %932 = vmatpush2.msra.mxu0 0.0
  %933 = vmatprep.subr.mxu0 0.0
  %934 = vmatpush2.msra.mxu0 0.0
  %935 = vmatprep.subr.mxu0 0.0
  %936 = vmatpush2.msra.mxu0 0.0
  %937 = vmatprep.subr.mxu0 0.0
  %938 = vmatpush2.msra.mxu0 0.0
  %939 = vmatprep.subr.mxu0 0.0
  %940 = vmatpush2.msra.mxu0 0.0
  %941 = vmatprep.subr.mxu0 0.0
  %942 = vmatpush2.msra.mxu0 0.0
  %943 = vmatprep.subr.mxu0 0.0
  %944 = vmatpush2.msra.mxu0 0.0
  %945 = vmatprep.subr.mxu0 0.0
  %946 = vmatpush2.msra.mxu0 0.0
  %947 = vmatprep.subr.mxu0 0.0
  %948 = vmatpush2.msra.mxu0 0.0
  %949 = vmatprep.subr.mxu0 0.0
  %950 = vmatpush2.msra.mxu0 0.0
  %951 = vmatprep.subr.mxu0 0.0
  %952 = vmatpush2.msra.mxu0 0.0
  %953 = vmatprep.subr.mxu0 0.0
  %954 = vmatpush2.msra.mxu0 0.0
  %955 = vmatprep.subr.mxu0 0.0
  %956 = vmatpush2.msra.mxu0 0.0
  %957 = vmatprep.subr.mxu0 0.0
  %958 = vmatpush2.msra.mxu0 0.0
  %959 = vmatprep.mubr.f32.mxu0 0.0
  %960 = vmatmul.mubr.f32.gmra.mxu0 %v800
  %v961 = vpop.f32.mrf.mxu0
  %v962 = vadd.f32 %v797, %v961
  %v963 = vpop.f32.mrf.mxu0
  %964 = vmatprep.mubr.f32.mxu0 0.0
  %965 = vmatmul.mubr.f32.gmra.mxu0 %v803
  %v966 = vpop.f32.mrf.mxu0
  %v967 = vadd.f32 %v797, %v966
  %v968 = vpop.f32.mrf.mxu0
  %969 = vmatprep.mubr.f32.mxu0 0.0
  %970 = vmatmul.mubr.f32.gmra.mxu0 %v806
  %v971 = vpop.f32.mrf.mxu0
  %v972 = vadd.f32 %v797, %v971
  %v973 = vpop.f32.mrf.mxu0
  %974 = vmatprep.mubr.f32.mxu0 0.0
  %975 = vmatmul.mubr.f32.gmra.mxu0 %v809
  %v976 = vpop.f32.mrf.mxu0
  %v977 = vadd.f32 %v797, %v976
  %v978 = vpop.f32.mrf.mxu0
  %979 = vmatprep.mubr.f32.mxu0 0.0
  %980 = vmatmul.mubr.f32.gmra.mxu0 %v812
  %v981 = vpop.f32.mrf.mxu0
  %v982 = vadd.f32 %v797, %v981
  %v983 = vpop.f32.mrf.mxu0
  %984 = vmatprep.mubr.f32.mxu0 0.0
  %985 = vmatmul.mubr.f32.gmra.mxu0 %v815
  %v986 = vpop.f32.mrf.mxu0
  %v987 = vadd.f32 %v797, %v986
  %v988 = vpop.f32.mrf.mxu0
  %989 = vmatprep.mubr.f32.mxu0 0.0
  %990 = vmatmul.mubr.f32.gmra.mxu0 %v818
  %v991 = vpop.f32.mrf.mxu0
  %v992 = vadd.f32 %v797, %v991
  %v993 = vpop.f32.mrf.mxu0
  %994 = vmatprep.mubr.f32.mxu0 0.0
  %995 = vmatmul.mubr.f32.gmra.mxu0 %v821
  %v996 = vpop.f32.mrf.mxu0
  %v997 = vadd.f32 %v797, %v996
  %v998 = vpop.f32.mrf.mxu0
  %999 = vmatprep.mubr.f32.mxu0 0.0
  %1000 = vmatmul.mubr.f32.gmra.mxu0 %v824
  %v1001 = vpop.f32.mrf.mxu0
  %v1002 = vadd.f32 %v797, %v1001
  %v1003 = vpop.f32.mrf.mxu0
  %1004 = vmatprep.mubr.f32.mxu0 0.0
  %1005 = vmatmul.mubr.f32.gmra.mxu0 %v827
  %v1006 = vpop.f32.mrf.mxu0
  %v1007 = vadd.f32 %v797, %v1006
  %v1008 = vpop.f32.mrf.mxu0
  %1009 = vmatprep.mubr.f32.mxu0 0.0
  %1010 = vmatmul.mubr.f32.gmra.mxu0 %v830
  %v1011 = vpop.f32.mrf.mxu0
  %v1012 = vadd.f32 %v797, %v1011
  %v1013 = vpop.f32.mrf.mxu0
  %1014 = vmatprep.mubr.f32.mxu0 0.0
  %1015 = vmatmul.mubr.f32.gmra.mxu0 %v833
  %v1016 = vpop.f32.mrf.mxu0
  %v1017 = vadd.f32 %v797, %v1016
  %v1018 = vpop.f32.mrf.mxu0
  %1019 = vmatprep.mubr.f32.mxu0 0.0
  %1020 = vmatmul.mubr.f32.gmra.mxu0 %v836
  %v1021 = vpop.f32.mrf.mxu0
  %v1022 = vadd.f32 %v797, %v1021
  %v1023 = vpop.f32.mrf.mxu0
  %1024 = vmatprep.mubr.f32.mxu0 0.0
  %1025 = vmatmul.mubr.f32.gmra.mxu0 %v839
  %v1026 = vpop.f32.mrf.mxu0
  %v1027 = vadd.f32 %v797, %v1026
  %v1028 = vpop.f32.mrf.mxu0
  %1029 = vmatprep.mubr.f32.mxu0 0.0
  %1030 = vmatmul.mubr.f32.gmra.mxu0 %v842
  %v1031 = vpop.f32.mrf.mxu0
  %v1032 = vadd.f32 %v797, %v1031
  %v1033 = vpop.f32.mrf.mxu0
  %1034 = vmatprep.mubr.f32.mxu0 0.0
  %1035 = vmatmul.mubr.f32.gmra.mxu0 %v845
  %v1036 = vpop.f32.mrf.mxu0
  %v1037 = vadd.f32 %v797, %v1036
  %v1038 = vpop.f32.mrf.mxu0
  %1039 = vmatprep.mubr.f32.mxu0 0.0
  %1040 = vmatmul.mubr.f32.gmra.mxu0 %v848
  %v1041 = vpop.f32.mrf.mxu0
  %v1042 = vadd.f32 %v797, %v1041
  %v1043 = vpop.f32.mrf.mxu0
  %1044 = vmatprep.mubr.f32.mxu0 0.0
  %1045 = vmatmul.mubr.f32.gmra.mxu0 %v851
  %v1046 = vpop.f32.mrf.mxu0
  %v1047 = vadd.f32 %v797, %v1046
  %v1048 = vpop.f32.mrf.mxu0
  %1049 = vmatprep.mubr.f32.mxu0 0.0
  %1050 = vmatmul.mubr.f32.gmra.mxu0 %v854
  %v1051 = vpop.f32.mrf.mxu0
  %v1052 = vadd.f32 %v797, %v1051
  %v1053 = vpop.f32.mrf.mxu0
  %1054 = vmatprep.mubr.f32.mxu0 0.0
  %1055 = vmatmul.mubr.f32.gmra.mxu0 %v857
  %v1056 = vpop.f32.mrf.mxu0
  %v1057 = vadd.f32 %v797, %v1056
  %v1058 = vpop.f32.mrf.mxu0
  %1059 = vmatprep.mubr.f32.mxu0 0.0
  %1060 = vmatmul.mubr.f32.gmra.mxu0 %v860
  %v1061 = vpop.f32.mrf.mxu0
  %v1062 = vadd.f32 %v797, %v1061
  %v1063 = vpop.f32.mrf.mxu0
  %1064 = vmatprep.mubr.f32.mxu0 0.0
  %1065 = vmatmul.mubr.f32.gmra.mxu0 %v863
  %v1066 = vpop.f32.mrf.mxu0
  %v1067 = vadd.f32 %v797, %v1066
  %v1068 = vpop.f32.mrf.mxu0
  %1069 = vmatprep.mubr.f32.mxu0 0.0
  %1070 = vmatmul.mubr.f32.gmra.mxu0 %v866
  %v1071 = vpop.f32.mrf.mxu0
  %v1072 = vadd.f32 %v797, %v1071
  %v1073 = vpop.f32.mrf.mxu0
  %1074 = vmatprep.mubr.f32.mxu0 0.0
  %1075 = vmatmul.mubr.f32.gmra.mxu0 %v869
  %v1076 = vpop.f32.mrf.mxu0
  %v1077 = vadd.f32 %v797, %v1076
  %v1078 = vpop.f32.mrf.mxu0
  %1079 = vmatprep.mubr.f32.mxu0 0.0
  %1080 = vmatmul.mubr.f32.gmra.mxu0 %v872
  %v1081 = vpop.f32.mrf.mxu0
  %v1082 = vadd.f32 %v797, %v1081
  %v1083 = vpop.f32.mrf.mxu0
  %1084 = vmatprep.mubr.f32.mxu0 0.0
  %1085 = vmatmul.mubr.f32.gmra.mxu0 %v875
  %v1086 = vpop.f32.mrf.mxu0
  %v1087 = vadd.f32 %v797, %v1086
  %v1088 = vpop.f32.mrf.mxu0
  %1089 = vmatprep.mubr.f32.mxu0 0.0
  %1090 = vmatmul.mubr.f32.gmra.mxu0 %v878
  %v1091 = vpop.f32.mrf.mxu0
  %v1092 = vadd.f32 %v797, %v1091
  %v1093 = vpop.f32.mrf.mxu0
  %1094 = vmatprep.mubr.f32.mxu0 0.0
  %1095 = vmatmul.mubr.f32.gmra.mxu0 %v881
  %v1096 = vpop.f32.mrf.mxu0
  %v1097 = vadd.f32 %v797, %v1096
  %v1098 = vpop.f32.mrf.mxu0
  %1099 = vmatprep.mubr.f32.mxu0 0.0
  %1100 = vmatmul.mubr.f32.gmra.mxu0 %v884
  %v1101 = vpop.f32.mrf.mxu0
  %v1102 = vadd.f32 %v797, %v1101
  %v1103 = vpop.f32.mrf.mxu0
  %1104 = vmatprep.mubr.f32.mxu0 0.0
  %1105 = vmatmul.mubr.f32.gmra.mxu0 %v887
  %v1106 = vpop.f32.mrf.mxu0
  %v1107 = vadd.f32 %v797, %v1106
  %v1108 = vpop.f32.mrf.mxu0
  %1109 = vmatprep.mubr.f32.mxu0 0.0
  %1110 = vmatmul.mubr.f32.gmra.mxu0 %v890
  %v1111 = vpop.f32.mrf.mxu0
  %v1112 = vadd.f32 %v797, %v1111
  %v1113 = vpop.f32.mrf.mxu0
  %1114 = vmatprep.mubr.f32.mxu0 0.0
  %1115 = vmatmul.mubr.f32.gmra.mxu0 %v893
  %v1116 = vpop.f32.mrf.mxu0
  %v1117 = vadd.f32 %v797, %v1116
  %v1118 = vpop.f32.mrf.mxu0
  %1119 = vdwg.mxu0
  %vm1120 = vcmask 64512
  %1121 = vst.msk [vmem:[%s7] sm:$0xff] %vm1120, %v962
  %1122 = vst.msk [vmem:[%s7 + $0x8] sm:$0xff] %vm1120, %v967
  %1123 = vst.msk [vmem:[%s7 + $0x10] sm:$0xff] %vm1120, %v972
  %1124 = vst.msk [vmem:[%s7 + $0x18] sm:$0xff] %vm1120, %v977
  %1125 = vst.msk [vmem:[%s7 + $0x20] sm:$0xff] %vm1120, %v982
  %1126 = vst.msk [vmem:[%s7 + $0x28] sm:$0xff] %vm1120, %v987
  %1127 = vst.msk [vmem:[%s7 + $0x30] sm:$0xff] %vm1120, %v992
  %1128 = vst.msk [vmem:[%s7 + $0x38] sm:$0xff] %vm1120, %v997
  %1129 = vst.msk [vmem:[%s7 + $0x40] sm:$0xff] %vm1120, %v1002
  %1130 = vst.msk [vmem:[%s7 + $0x48] sm:$0xff] %vm1120, %v1007
  %1131 = vst.msk [vmem:[%s7 + $0x50] sm:$0xff] %vm1120, %v1012
  %1132 = vst.msk [vmem:[%s7 + $0x58] sm:$0xff] %vm1120, %v1017
  %1133 = vst.msk [vmem:[%s7 + $0x60] sm:$0xff] %vm1120, %v1022
  %1134 = vst.msk [vmem:[%s7 + $0x68] sm:$0xff] %vm1120, %v1027
  %1135 = vst.msk [vmem:[%s7 + $0x70] sm:$0xff] %vm1120, %v1032
  %1136 = vst.msk [vmem:[%s7 + $0x78] sm:$0xff] %vm1120, %v1037
  %1137 = vst.msk [vmem:[%s7 + $0x80] sm:$0xff] %vm1120, %v1042
  %1138 = vst.msk [vmem:[%s7 + $0x88] sm:$0xff] %vm1120, %v1047
  %1139 = vst.msk [vmem:[%s7 + $0x90] sm:$0xff] %vm1120, %v1052
  %1140 = vst.msk [vmem:[%s7 + $0x98] sm:$0xff] %vm1120, %v1057
  %1141 = vst.msk [vmem:[%s7 + $0xa0] sm:$0xff] %vm1120, %v1062
  %1142 = vst.msk [vmem:[%s7 + $0xa8] sm:$0xff] %vm1120, %v1067
  %1143 = vst.msk [vmem:[%s7 + $0xb0] sm:$0xff] %vm1120, %v1072
  %1144 = vst.msk [vmem:[%s7 + $0xb8] sm:$0xff] %vm1120, %v1077
  %1145 = vst.msk [vmem:[%s7 + $0xc0] sm:$0xff] %vm1120, %v1082
  %1146 = vst.msk [vmem:[%s7 + $0xc8] sm:$0xff] %vm1120, %v1087
  %1147 = vst.msk [vmem:[%s7 + $0xd0] sm:$0xff] %vm1120, %v1092
  %1148 = vst.msk [vmem:[%s7 + $0xd8] sm:$0xff] %vm1120, %v1097
  %1149 = vst.msk [vmem:[%s7 + $0xe0] sm:$0xff] %vm1120, %v1102
  %1150 = vst.msk [vmem:[%s7 + $0xe8] sm:$0xff] %vm1120, %v1107
  %1151 = vst.msk [vmem:[%s7 + $0xf0] sm:$0xff] %vm1120, %v1112
  %1152 = vst.msk [vmem:[%s7 + $0xf8] sm:$0xff] %vm1120, %v1117
  %1185 = vrot.lane.b32.xlu0 %v962, 120
  %v1186 = vpop.permute.xlu0 %1185
  %1187 = vrot.lane.b32.xlu0 %v967, 120
  %v1188 = vpop.permute.xlu0 %1187
  %1189 = vrot.lane.b32.xlu0 %v972, 120
  %v1190 = vpop.permute.xlu0 %1189
  %1191 = vrot.lane.b32.xlu0 %v977, 120
  %v1192 = vpop.permute.xlu0 %1191
  %1193 = vrot.lane.b32.xlu0 %v982, 120
  %v1194 = vpop.permute.xlu0 %1193
  %1195 = vrot.lane.b32.xlu0 %v987, 120
  %v1196 = vpop.permute.xlu0 %1195
  %1197 = vrot.lane.b32.xlu0 %v992, 120
  %v1198 = vpop.permute.xlu0 %1197
  %1199 = vrot.lane.b32.xlu0 %v997, 120
  %v1200 = vpop.permute.xlu0 %1199
  %1201 = vrot.lane.b32.xlu0 %v1002, 120
  %v1202 = vpop.permute.xlu0 %1201
  %1203 = vrot.lane.b32.xlu0 %v1007, 120
  %v1204 = vpop.permute.xlu0 %1203
  %1205 = vrot.lane.b32.xlu0 %v1012, 120
  %v1206 = vpop.permute.xlu0 %1205
  %1207 = vrot.lane.b32.xlu0 %v1017, 120
  %v1208 = vpop.permute.xlu0 %1207
  %1209 = vrot.lane.b32.xlu0 %v1022, 120
  %v1210 = vpop.permute.xlu0 %1209
  %1211 = vrot.lane.b32.xlu0 %v1027, 120
  %v1212 = vpop.permute.xlu0 %1211
  %1213 = vrot.lane.b32.xlu0 %v1032, 120
  %v1214 = vpop.permute.xlu0 %1213
  %1215 = vrot.lane.b32.xlu0 %v1037, 120
  %v1216 = vpop.permute.xlu0 %1215
  %1217 = vrot.lane.b32.xlu0 %v1042, 120
  %v1218 = vpop.permute.xlu0 %1217
  %1219 = vrot.lane.b32.xlu0 %v1047, 120
  %v1220 = vpop.permute.xlu0 %1219
  %1221 = vrot.lane.b32.xlu0 %v1052, 120
  %v1222 = vpop.permute.xlu0 %1221
  %1223 = vrot.lane.b32.xlu0 %v1057, 120
  %v1224 = vpop.permute.xlu0 %1223
  %1225 = vrot.lane.b32.xlu0 %v1062, 120
  %v1226 = vpop.permute.xlu0 %1225
  %1227 = vrot.lane.b32.xlu0 %v1067, 120
  %v1228 = vpop.permute.xlu0 %1227
  %1229 = vrot.lane.b32.xlu0 %v1072, 120
  %v1230 = vpop.permute.xlu0 %1229
  %1231 = vrot.lane.b32.xlu0 %v1077, 120
  %v1232 = vpop.permute.xlu0 %1231
  %1233 = vrot.lane.b32.xlu0 %v1082, 120
  %v1234 = vpop.permute.xlu0 %1233
  %1235 = vrot.lane.b32.xlu0 %v1087, 120
  %v1236 = vpop.permute.xlu0 %1235
  %1237 = vrot.lane.b32.xlu0 %v1092, 120
  %v1238 = vpop.permute.xlu0 %1237
  %1239 = vrot.lane.b32.xlu0 %v1097, 120
  %v1240 = vpop.permute.xlu0 %1239
  %1241 = vrot.lane.b32.xlu0 %v1102, 120
  %v1242 = vpop.permute.xlu0 %1241
  %1243 = vrot.lane.b32.xlu0 %v1107, 120
  %v1244 = vpop.permute.xlu0 %1243
  %1245 = vrot.lane.b32.xlu0 %v1112, 120
  %v1246 = vpop.permute.xlu0 %1245
  %1247 = vrot.lane.b32.xlu0 %v1117, 120
  %v1248 = vpop.permute.xlu0 %1247
  %1281 = vst.msk [vmem:[%s8] sm:$0xff] %vm1120, %v1186
  %1282 = vst.msk [vmem:[%s8 + $0x8] sm:$0xff] %vm1120, %v1188
  %1283 = vst.msk [vmem:[%s8 + $0x10] sm:$0xff] %vm1120, %v1190
  %1284 = vst.msk [vmem:[%s8 + $0x18] sm:$0xff] %vm1120, %v1192
  %1285 = vst.msk [vmem:[%s8 + $0x20] sm:$0xff] %vm1120, %v1194
  %1286 = vst.msk [vmem:[%s8 + $0x28] sm:$0xff] %vm1120, %v1196
  %1287 = vst.msk [vmem:[%s8 + $0x30] sm:$0xff] %vm1120, %v1198
  %1288 = vst.msk [vmem:[%s8 + $0x38] sm:$0xff] %vm1120, %v1200
  %1289 = vst.msk [vmem:[%s8 + $0x40] sm:$0xff] %vm1120, %v1202
  %1290 = vst.msk [vmem:[%s8 + $0x48] sm:$0xff] %vm1120, %v1204
  %1291 = vst.msk [vmem:[%s8 + $0x50] sm:$0xff] %vm1120, %v1206
  %1292 = vst.msk [vmem:[%s8 + $0x58] sm:$0xff] %vm1120, %v1208
  %1293 = vst.msk [vmem:[%s8 + $0x60] sm:$0xff] %vm1120, %v1210
  %1294 = vst.msk [vmem:[%s8 + $0x68] sm:$0xff] %vm1120, %v1212
  %1295 = vst.msk [vmem:[%s8 + $0x70] sm:$0xff] %vm1120, %v1214
  %1296 = vst.msk [vmem:[%s8 + $0x78] sm:$0xff] %vm1120, %v1216
  %1297 = vst.msk [vmem:[%s8 + $0x80] sm:$0xff] %vm1120, %v1218
  %1298 = vst.msk [vmem:[%s8 + $0x88] sm:$0xff] %vm1120, %v1220
  %1299 = vst.msk [vmem:[%s8 + $0x90] sm:$0xff] %vm1120, %v1222
  %1300 = vst.msk [vmem:[%s8 + $0x98] sm:$0xff] %vm1120, %v1224
  %1301 = vst.msk [vmem:[%s8 + $0xa0] sm:$0xff] %vm1120, %v1226
  %1302 = vst.msk [vmem:[%s8 + $0xa8] sm:$0xff] %vm1120, %v1228
  %1303 = vst.msk [vmem:[%s8 + $0xb0] sm:$0xff] %vm1120, %v1230
  %1304 = vst.msk [vmem:[%s8 + $0xb8] sm:$0xff] %vm1120, %v1232
  %1305 = vst.msk [vmem:[%s8 + $0xc0] sm:$0xff] %vm1120, %v1234
  %1306 = vst.msk [vmem:[%s8 + $0xc8] sm:$0xff] %vm1120, %v1236
  %1307 = vst.msk [vmem:[%s8 + $0xd0] sm:$0xff] %vm1120, %v1238
  %1308 = vst.msk [vmem:[%s8 + $0xd8] sm:$0xff] %vm1120, %v1240
  %1309 = vst.msk [vmem:[%s8 + $0xe0] sm:$0xff] %vm1120, %v1242
  %1310 = vst.msk [vmem:[%s8 + $0xe8] sm:$0xff] %vm1120, %v1244
  %1311 = vst.msk [vmem:[%s8 + $0xf0] sm:$0xff] %vm1120, %v1246
  %1312 = vst.msk [vmem:[%s8 + $0xf8] sm:$0xff] %vm1120, %v1248
  // Predicated region
  $region30: #{encoder_forward.1} parent=0 // pred_check
    _
  $region31: #{encoder_forward.1} parent=0 // pred_check_branch
    %1314 = sbr.rel (0) target = $region33
  $region32: #{encoder_forward.1} parent=0 // pred_region
    _
  $region33: #{encoder_forward.1} parent=0 // pred_fallthru
    _
  // Predicated region
  $region34: #{encoder_forward.1} parent=0 // pred_check
    _
  $region35: #{encoder_forward.1} parent=0 // pred_check_branch
    %1316 = sbr.rel (0) target = $region37
  $region36: #{encoder_forward.1} parent=0 // pred_region
    _
  $region37: #{encoder_forward.1} parent=0 // pred_fallthru
    _
  // Predicated region
  $region38: #{encoder_forward.1} parent=0 // pred_check
    _
  $region39: #{encoder_forward.1} parent=0 // pred_check_branch
    %1318 = sbr.rel (0) target = $region41
  $region40: #{encoder_forward.1} parent=0 // pred_region
    _
  $region41: #{encoder_forward.1} parent=0 // pred_fallthru
    _
  // Predicated region
  $region42: #{encoder_forward.1} parent=0 // pred_check
    _
  $region43: #{encoder_forward.1} parent=0 // pred_check_branch
    %1320 = sbr.rel (0) target = $region45
  $region44: #{encoder_forward.1} parent=0 // pred_region
    _
  $region45: #{encoder_forward.1} parent=0 // pred_fallthru
    _

</llo_original>
